<compile_context>
chip_gen: v5e
topology: v5e:2x2
jax: 0.10.0
libtpu: 0.0.40
codegen_flags: <defaults>
</compile_context>

<pallas_src>
import functools
import math

import jax
import jax.numpy as jnp
from jax.experimental import pallas as pl
from jax.experimental.pallas import tpu as pltpu


def _arcface_kernel(labels_ref, logits_ref, out_ref, *, s, cos_m, sin_m, eps):
    x = logits_ref[...].astype(jnp.float32)               # (bn, bc), f32 compute
    c = jnp.clip(x, -1.0 + eps, 1.0 - eps)

    lab = labels_ref[...]                                  # (bn, 1) int32
    bc = c.shape[1]
    # Global class index for this column tile.
    col = jax.lax.broadcasted_iota(jnp.int32, c.shape, 1) + pl.program_id(1) * bc
    # col >= 0 everywhere, so label == -1 (ignored row) can never match:
    # no extra full-tile `& (lab != -1)` term is needed.
    is_target = col == lab

    # cos(arccos(c) + m) = c*cos(m) - sqrt(1-c^2)*sin(m); clip keeps 1-c^2 > 0.
    # Note: ragged edge blocks may read unspecified (possibly NaN) values past
    # the array bounds; any resulting NaNs land only in lanes whose stores are
    # dropped by the edge-block write mask, so they are harmless.
    sin_theta = jnp.sqrt(1.0 - c * c)
    margined = c * cos_m - sin_theta * sin_m

    out_ref[...] = (jnp.where(is_target, margined, c) * s).astype(out_ref.dtype)


def _round_up(x, m):
    return ((x + m - 1) // m) * m


def arcface(logits: jax.Array, labels: jax.Array, *, s: float = 64.0,
            margin: float = 0.5, tile_n: int = 256, tile_c: int = 4096):
    """Pallas ArcFace forward. Returns (adjusted_logits, None) like the torch module.

    The output aliases the `logits` HBM buffer; donate `logits` at the jit
    boundary (donate_argnums) if it is dead afterwards to avoid a copy.
    Default 256 x 4096 blocks (4 MiB f32 / 2 MiB bf16) give long contiguous
    per-row DMA bursts and sit near the HBM roofline on v5e/v6e/v7x; the
    vmem limit is sized from the block and capped v7x-safe.
    """
    N, C = logits.shape
    itemsize = jnp.dtype(logits.dtype).itemsize
    row_align = max(8, 32 // itemsize)        # f32: 8, bf16: 16, int8: 32 sublanes

    # Block sizes: sublane/lane aligned, never (much) larger than the array.
    bn = min(_round_up(tile_n, row_align), _round_up(N, row_align))
    bc = min(_round_up(tile_c, 128), _round_up(C, 128))

    # v7x has 2 TensorCores per chip: if the whole problem fits in one block,
    # split the row axis so both cores get a "parallel" block.
    if pl.cdiv(N, bn) == 1 and pl.cdiv(C, bc) == 1 and N >= 2 * row_align:
        bn = _round_up(pl.cdiv(N, 2), row_align)

    labels2d = labels.astype(jnp.int32).reshape(N, 1)

    kernel = functools.partial(
        _arcface_kernel, s=float(s),
        cos_m=math.cos(margin), sin_m=math.sin(margin), eps=1e-7)

    # 2 double-buffered input blocks + 2 output blocks + labels + slack,
    # floored at 16 MiB and capped at 48 MiB (safe under v7x's 64 MiB/TC).
    block_bytes = bn * bc * itemsize
    vmem_limit = min(max(4 * block_bytes + (8 << 20), 16 << 20), 48 << 20)

    out = pl.pallas_call(
        kernel,
        out_shape=jax.ShapeDtypeStruct((N, C), logits.dtype),
        grid_spec=pltpu.PrefetchScalarGridSpec(
            num_scalar_prefetch=0,
            # Ragged edges (N % bn, C % bc != 0) handled by Pallas edge blocks.
            grid=(pl.cdiv(N, bn), pl.cdiv(C, bc)),
            in_specs=[
                pl.BlockSpec((bn, 1), lambda i, j: (i, 0)),    # labels (reused over j)
                pl.BlockSpec((bn, bc), lambda i, j: (i, j)),   # logits tile
            ],
            out_specs=pl.BlockSpec((bn, bc), lambda i, j: (i, j)),
        ),
        # Output aliases the logits HBM buffer (inputs: 0=labels2d, 1=logits).
        input_output_aliases={1: 0},
        compiler_params=pltpu.CompilerParams(
            dimension_semantics=("parallel", "parallel"),
            vmem_limit_bytes=vmem_limit,
        ),
    )(labels2d, logits)

    return out, None


def _reference(logits, labels, s=64.0, margin=0.5):
    """Pure-JAX reference mirroring the PyTorch forward."""
    c = jnp.clip(logits.astype(jnp.float32), -1.0 + 1e-7, 1.0 - 1e-7)
    theta = jnp.arccos(c)
    col = jnp.arange(logits.shape[1])[None, :]
    is_target = (col == labels[:, None]) & (labels[:, None] != -1)
    adjusted = jnp.where(is_target, jnp.cos(theta + margin), c)
    return (adjusted * s).astype(logits.dtype)


if __name__ == "__main__":
    key = jax.random.PRNGKey(0)
    k1, k2, k3, k4 = jax.random.split(key, 4)

    # Small synthetic shapes: 16 samples x 256 classes.
    N, C = 16, 256
    logits = jax.random.uniform(k1, (N, C), jnp.float32, minval=-1.0, maxval=1.0)
    labels = jax.random.randint(k2, (N,), 0, C, dtype=jnp.int32)
    labels = labels.at[3].set(-1)  # one ignored row

    ref = _reference(logits, labels, 64.0, 0.5)

    # Default large-tile path (row axis auto-split into 2 parallel blocks).
    out, aux = arcface(logits, labels, s=64.0, margin=0.5)
    out = jax.block_until_ready(out)
    assert aux is None
    assert jnp.allclose(out, ref, atol=1e-4, rtol=1e-5), "mismatch (default tiles)"

    # Force a 2-D multi-tile grid to exercise the per-column-tile iota offset.
    out_tiled, _ = arcface(logits, labels, s=64.0, margin=0.5, tile_n=8, tile_c=128)
    out_tiled = jax.block_until_ready(out_tiled)
    assert jnp.allclose(out_tiled, ref, atol=1e-4, rtol=1e-5), "mismatch (tiled grid)"

    # Ragged shapes: N, C not tile multiples -> Pallas edge blocks, no jnp.pad.
    N2, C2 = 13, 200
    logits2 = jax.random.uniform(k3, (N2, C2), jnp.float32, minval=-1.0, maxval=1.0)
    labels2 = jax.random.randint(k4, (N2,), 0, C2, dtype=jnp.int32)
    labels2 = labels2.at[0].set(-1)
    out2, _ = arcface(logits2, labels2, s=64.0, margin=0.5, tile_n=8, tile_c=128)
    out2 = jax.block_until_ready(out2)
    ref2 = _reference(logits2, labels2, 64.0, 0.5)
    assert jnp.allclose(out2, ref2, atol=1e-4, rtol=1e-5), "mismatch (ragged edge blocks)"

    # bf16 storage path (f32 compute in-kernel, 16-row sublane alignment).
    logits3 = logits.astype(jnp.bfloat16)
    out3, _ = arcface(logits3, labels, s=64.0, margin=0.5)
    out3 = jax.block_until_ready(out3)
    ref3 = _reference(logits3, labels, 64.0, 0.5)
    assert jnp.allclose(out3.astype(jnp.float32), ref3.astype(jnp.float32),
                        atol=0.5, rtol=1e-2), "mismatch (bf16)"

    print("KERNEL_OK")
</pallas_src>

<mosaic_0001>
module attributes {stable_mosaic.version = 11 : i64} {
  func.func @_arcface_kernel(%arg0: i32, %arg1: i32, %arg2: memref<8x1xi32, #tpu.memory_space<vmem>>, %arg3: memref<8x256xf32, #tpu.memory_space<vmem>>, %arg4: memref<8x256xf32, #tpu.memory_space<vmem>>) attributes {dimension_semantics = [#tpu.dimension_semantics<parallel>, #tpu.dimension_semantics<parallel>], iteration_bounds = array<i64: 2, 1>, scalar_prefetch = 0 : i64, scratch_operands = 0 : i64, tpu.core_type = #tpu.core_type<tc>, window_params = [{transform_indices = @transform_0, window_bounds = array<i64: 8, 1>}, {transform_indices = @transform_1, window_bounds = array<i64: 8, 256>}, {transform_indices = @transform_2, window_bounds = array<i64: 8, 256>}]} {
    %c0 = arith.constant 0 : index
    %c0_0 = arith.constant 0 : index
    %0 = vector.load %arg3[%c0, %c0_0] : memref<8x256xf32, #tpu.memory_space<vmem>>, vector<8x256xf32>
    %cst = arith.constant -0.99999988 : f32
    %cst_1 = arith.constant 0.99999988 : f32
    %1 = vector.broadcast %cst : f32 to vector<8x256xf32>
    %2 = arith.maximumf %1, %0 : vector<8x256xf32>
    %3 = vector.broadcast %cst_1 : f32 to vector<8x256xf32>
    %4 = arith.minimumf %3, %2 : vector<8x256xf32>
    %c0_2 = arith.constant 0 : index
    %c0_3 = arith.constant 0 : index
    %5 = vector.load %arg2[%c0_2, %c0_3] : memref<8x1xi32, #tpu.memory_space<vmem>>, vector<8x1xi32>
    %6 = tpu.iota {dimensions = array<i32: 1>} : vector<8x256xi32>
    %c256_i32 = arith.constant 256 : i32
    %7 = arith.muli %arg1, %c256_i32 : i32
    %8 = vector.broadcast %7 : i32 to vector<8x256xi32>
    %9 = arith.addi %6, %8 : vector<8x256xi32>
    %10 = vector.broadcast %5 : vector<8x1xi32> to vector<8x256xi32>
    %11 = arith.cmpi eq, %9, %10 : vector<8x256xi32>
    %12 = arith.mulf %4, %4 : vector<8x256xf32>
    %cst_4 = arith.constant 1.000000e+00 : f32
    %13 = vector.broadcast %cst_4 : f32 to vector<8x256xf32>
    %14 = arith.subf %13, %12 : vector<8x256xf32>
    %15 = math.sqrt %14 : vector<8x256xf32>
    %cst_5 = arith.constant 0.87758255 : f32
    %16 = vector.broadcast %cst_5 : f32 to vector<8x256xf32>
    %17 = arith.mulf %4, %16 : vector<8x256xf32>
    %cst_6 = arith.constant 0.47942555 : f32
    %18 = vector.broadcast %cst_6 : f32 to vector<8x256xf32>
    %19 = arith.mulf %15, %18 : vector<8x256xf32>
    %20 = arith.subf %17, %19 : vector<8x256xf32>
    %21 = arith.select %11, %20, %4 : vector<8x256xi1>, vector<8x256xf32>
    %cst_7 = arith.constant 6.400000e+01 : f32
    %22 = vector.broadcast %cst_7 : f32 to vector<8x256xf32>
    %23 = arith.mulf %21, %22 : vector<8x256xf32>
    %c0_8 = arith.constant 0 : index
    %c0_9 = arith.constant 0 : index
    %24 = vector.load %arg4[%c0_8, %c0_9] : memref<8x256xf32, #tpu.memory_space<vmem>>, vector<8x256xf32>
    tpu.vector_store %arg4[%c0_8, %c0_9], %23 {strides = array<i32>} : memref<8x256xf32, #tpu.memory_space<vmem>>, vector<8x256xf32>,
    return
  }
  func.func @transform_0(%arg0: i32, %arg1: i32) -> (i32, i32) {
    %c0_i32 = arith.constant 0 : i32
    %c0_i32_0 = arith.constant 0 : i32
    return %arg0, %c0_i32 : i32, i32
  }
  func.func @transform_1(%arg0: i32, %arg1: i32) -> (i32, i32) {
    %c0_i32 = arith.constant 0 : i32
    return %arg0, %arg1 : i32, i32
  }
  func.func @transform_2(%arg0: i32, %arg1: i32) -> (i32, i32) {
    %c0_i32 = arith.constant 0 : i32
    return %arg0, %arg1 : i32, i32
  }
}

</mosaic_0001>

<llo_original>
// kernel: tpu_custom_call.1
$region0: #{tpu_custom_call.1}
  #allocation0 [shape = 'u32[]', space=smem, size = 0x4, offset = 0x4, fixed_abs, tag = 'smem constant byte address 0x4 - core index']
  #allocation1 [shape = 'u32[72,128]{1,0:T(1,128)}', space=vmem, size = 0x9000, scoped, tag = 'internal scratch']
  %s0 = inlined_call_operand.vmem [shape: s32[16,1], index: 0, kind: input, shape index: {}]
  %s1 = inlined_call_operand.hbm [shape: f32[16,256], index: 1, kind: input, shape index: {}, may-alias: {1,2}]
  %s2 = inlined_call_operand.hbm [shape: f32[16,256], index: 2, kind: output, shape index: {}, may-alias: {1,2}]
  %s3 = sld [smem:[#allocation0]]
  $region45: #{tpu_custom_call.1} parent=0
    _
  %s5 = ssub.s32 1, %s3
  %s6 = scalar_select 0, %s5, %s3
  $region1: #{tpu_custom_call.1} parent=0
    #allocation2 [shape = 'u8[16384]{0}', space=vmem, size = 0x4000, scoped, tag = 'input window, operand 1']
    #allocation3 [shape = 's32[2]{0}', space=sflag, size = 0x8, scoped, tag = 'scoped memory for tpu_custom_call.1']
    #allocation4 [shape = 's32[2]{0}', space=sflag, size = 0x8, scoped, tag = 'scoped memory for tpu_custom_call.1']
    #allocation5 [shape = 'u8[16384]{0}', space=vmem, size = 0x4000, scoped, tag = 'output window, operand 0']
    %7 = vsyncpa [#allocation3], 0
    %s8 = scalar_lea.sflag [#allocation3], 1
    %9 = vsyncpa %s8, 0
    %10 = vsyncpa [#allocation4], 0
    %s11 = scalar_lea.sflag [#allocation4], 1
    %12 = vsyncpa %s11, 0
    loop: start=0, step=1, limit=4
    $region2: #{tpu_custom_call.1} parent=1 // loop_pre_header
      _
    $region3: #{tpu_custom_call.1} parent=1 // loop_header
      %s14 = sphi 0, %s18
      %p15 = scmp.ge.s32.totalorder %s14, 4
      %s21 = sphi 0, %s33
      %s22 = sphi 0, %s29
      %s23 = sphi 0, %s21
      %s24 = sphi 0, %s22
      %s25 = sphi 0, %s23
      %s26 = sphi 0, %s24
      %s36 = sphi 0, %s38
      %s39 = sphi 0, %s36
      %s40 = sphi 0, %s39
      %s56 = sphi 0, %s40
      %s64 = sphi 0, %s66
      %s67 = sphi 0, %s64
      %s68 = sphi 0, %s67
      %s84 = sphi 0, %s68
      %s92 = sphi 0, %s94
      %s95 = sphi 0, %s92
      %s96 = sphi 0, %s95
      %s112 = sphi 0, %s96
    $region4: #{tpu_custom_call.1} parent=1 // loop_header_branch
      %17 = sbr.rel (%p15) target = $region8
    $region5: #{tpu_custom_call.1} parent=1 // loop_body
      %s19 = ssub.s32 %s14, 1
      %s20 = ssub.s32 %s14, 2
      %s27 = sadd.s32 1, %s22
      %p28 = scmp.ge.s32.totalorder %s27, 1
      %s29 = scalar_select %p28, 0, %s27
      %s30 = sadd.s32 1, %s21
      %s31 = scalar_select %p28, %s30, %s21
      %p32 = scmp.ge.s32.totalorder %s31, 2
      %s33 = scalar_select %p32, 0, %s31
      %s34 = ssub.s32 %s21, %s33
      %p35 = scmp.eq.s32.totalorder %s34, 0
      %s37 = sadd.s32 %s36, 1
      %s38 = scalar_select %p35, %s36, %s37
      %p41 = pneg %p35
      %p42 = scmp.eq.s32.totalorder %s14, 1
      %p43 = por %p41, %p42
      %p44 = scmp.ne.s32.totalorder %s36, %s39
      %p45 = scmp.eq.s32.totalorder %s14, 0
      %p46 = por %p44, %p45
      %p47 = scmp.ne.s32.totalorder %s36, %s39
      %p48 = scmp.eq.s32.totalorder %s19, 1
      %p49 = por %p47, %p48
      %p50 = scmp.ne.s32.totalorder %s39, %s40
      %p51 = scmp.eq.s32.totalorder %s19, 0
      %p52 = por %p50, %p51
      %p53 = scmp.ne.s32.totalorder %s39, %s40
      %p54 = scmp.eq.s32.totalorder %s20, 1
      %p55 = por %p53, %p54
      %p57 = scmp.ne.s32.totalorder %s40, %s56
      %p58 = scmp.eq.s32.totalorder %s20, 0
      %p59 = por %p57, %p58
      %s60 = ssub.s32 %s21, %s33
      %s61 = ssub.s32 %s22, %s29
      %s62 = sor.u32 %s60, %s61
      %p63 = scmp.eq.s32.totalorder %s62, 0
      %s65 = sadd.s32 %s64, 1
      %s66 = scalar_select %p63, %s64, %s65
      %p69 = pneg %p63
      %p70 = scmp.eq.s32.totalorder %s14, 1
      %p71 = por %p69, %p70
      %p72 = scmp.ne.s32.totalorder %s64, %s67
      %p73 = scmp.eq.s32.totalorder %s14, 0
      %p74 = por %p72, %p73
      %p75 = scmp.ne.s32.totalorder %s64, %s67
      %p76 = scmp.eq.s32.totalorder %s19, 1
      %p77 = por %p75, %p76
      %p78 = scmp.ne.s32.totalorder %s67, %s68
      %p79 = scmp.eq.s32.totalorder %s19, 0
      %p80 = por %p78, %p79
      %p81 = scmp.ne.s32.totalorder %s67, %s68
      %p82 = scmp.eq.s32.totalorder %s20, 1
      %p83 = por %p81, %p82
      %p85 = scmp.ne.s32.totalorder %s68, %s84
      %p86 = scmp.eq.s32.totalorder %s20, 0
      %p87 = por %p85, %p86
      %s88 = ssub.s32 %s21, %s33
      %s89 = ssub.s32 %s22, %s29
      %s90 = sor.u32 %s88, %s89
      %p91 = scmp.eq.s32.totalorder %s90, 0
      %s93 = sadd.s32 %s92, 1
      %s94 = scalar_select %p91, %s92, %s93
      %p97 = pneg %p91
      %p98 = scmp.eq.s32.totalorder %s14, 1
      %p99 = por %p97, %p98
      %p100 = scmp.ne.s32.totalorder %s92, %s95
      %p101 = scmp.eq.s32.totalorder %s14, 0
      %p102 = por %p100, %p101
      %p103 = scmp.ne.s32.totalorder %s92, %s95
      %p104 = scmp.eq.s32.totalorder %s19, 1
      %p105 = por %p103, %p104
      %p106 = scmp.ne.s32.totalorder %s95, %s96
      %p107 = scmp.eq.s32.totalorder %s19, 0
      %p108 = por %p106, %p107
      %p109 = scmp.ne.s32.totalorder %s95, %s96
      %p110 = scmp.eq.s32.totalorder %s20, 1
      %p111 = por %p109, %p110
      %p113 = scmp.ne.s32.totalorder %s96, %s112
      %p114 = scmp.eq.s32.totalorder %s20, 0
      %p115 = por %p113, %p114
      %p116 = scmp.le.s32.totalorder 1, %s14
      %p117 = scmp.lt.s32.totalorder %s14, 3
      %p118 = pnand %p116, %p117
      %p119 = pneg %p118
      // Predicated region
      $region9: #{tpu_custom_call.1} parent=5 // pred_check
        _
      $region10: #{tpu_custom_call.1} parent=5 // pred_check_branch
        %121 = sbr.rel (%p118) target = $region12
      $region11: #{tpu_custom_call.1} parent=5 // pred_region
        %s122 = ssub.s32 %s14, 1
      $region12: #{tpu_custom_call.1} parent=5 // pred_fallthru
        _
      %p123 = scmp.lt.s32.totalorder %s14, 2
      // Predicated region
      $region13: #{tpu_custom_call.1} parent=5 // pred_check
        %p124 = pneg %p123
      $region14: #{tpu_custom_call.1} parent=5 // pred_check_branch
        %126 = sbr.rel (%p124) target = $region16
      $region15: #{tpu_custom_call.1} parent=5 // pred_region
        // Predicated region
        $region17: #{tpu_custom_call.1} parent=15 // pred_check
          %p127 = pneg %p46
        $region18: #{tpu_custom_call.1} parent=15 // pred_check_branch
          %129 = sbr.rel (%p127) target = $region20
        $region19: #{tpu_custom_call.1} parent=15 // pred_region
          %p130 = scmp.lt.s32.totalorder %s21, 1
          %s131 = scalar_select %p130, %s21, 1
          %s132 = smul.addr %s131, 8
          %s133 = scalar_lea.vmem %s0, %s132
        $region20: #{tpu_custom_call.1} parent=15 // pred_fallthru
          _
        // Predicated region
        $region21: #{tpu_custom_call.1} parent=15 // pred_check
          %p134 = pneg %p74
        $region22: #{tpu_custom_call.1} parent=15 // pred_check_branch
          %136 = sbr.rel (%p134) target = $region24
        $region23: #{tpu_custom_call.1} parent=15 // pred_region
          %s137 = sand.u32 %s64, 1
          %s138 = scalar_lea.sflag [#allocation3], %s137
          %s139 = sand.u32 %s64, 1
          %s140 = smul.addr %s139, 16
          %s141 = scalar_lea.vmem [#allocation2], %s140
          %s142 = smul.u32 2, %s22
          %144 = vsyncadd %s138, 0
          %s145 = smul.addr %s21, 2
          %s146 = sadd.s32 %s142, %s145
          %s147 = smul.addr %s146, 8
          %s148 = scalar_lea.hbm %s1, %s147
          %s150 = sshll.u32 %s148, 4
          %s151 = int_to_ptr.hbm [resolvable:$true] %s150
          %s152 = sshll.u32 %s141, 4
          %s153 = int_to_ptr.vmem [resolvable:$true] %s152
          %155 = dma.hbm_to_vmem [thread:$0]  %s151, 256, %s153, %s138
        $region24: #{tpu_custom_call.1} parent=15 // pred_fallthru
          _
      $region16: #{tpu_custom_call.1} parent=5 // pred_fallthru
        _
      %p156 = scmp.le.s32.totalorder 1, %s14
      %p157 = scmp.lt.s32.totalorder %s14, 3
      %p158 = pnand %p156, %p157
      %p159 = pneg %p158
      // Predicated region
      $region25: #{tpu_custom_call.1} parent=5 // pred_check
        _
      $region26: #{tpu_custom_call.1} parent=5 // pred_check_branch
        %161 = sbr.rel (%p158) target = $region28
      $region27: #{tpu_custom_call.1} parent=5 // pred_region
        %s162 = ssub.s32 %s14, 1
        %s163 = sand.u32 %s67, 1
        %s164 = scalar_lea.sflag [#allocation3], %s163
        %s165 = sand.u32 %s67, 1
        %s166 = smul.addr %s165, 16
        %s167 = scalar_lea.vmem [#allocation2], %s166
        // Predicated region
        $region29: #{tpu_custom_call.1} parent=27 // pred_check
          %p168 = pneg %p80
        $region30: #{tpu_custom_call.1} parent=27 // pred_check_branch
          %170 = sbr.rel (%p168) target = $region32
        $region31: #{tpu_custom_call.1} parent=27 // pred_region
          %172 = dma.done %s164, 256
        $region32: #{tpu_custom_call.1} parent=27 // pred_fallthru
          _
        %p173 = scmp.lt.s32.totalorder %s23, 1
        %s174 = scalar_select %p173, %s23, 1
        %s175 = smul.addr %s174, 8
        %s176 = scalar_lea.vmem %s0, %s175
        %p177 = pneg %p52
        %p178 = pneg %p49
        %s179 = sand.u32 %s67, 1
        %s180 = scalar_lea.sflag [#allocation3], %s179
        %s181 = sand.u32 %s67, 1
        %s182 = smul.addr %s181, 16
        %s183 = scalar_lea.vmem [#allocation2], %s182
        %p184 = pneg %p80
        %p185 = pneg %p77
        %p186 = pneg %p108
        %p187 = pneg %p105
        %s188 = sand.u32 %s95, 1
        %s189 = scalar_lea.sflag [#allocation4], %s188
        %s190 = sand.u32 %s95, 1
        %s191 = smul.addr %s190, 16
        %s192 = scalar_lea.vmem [#allocation5], %s191
        %p193 = scmp.lt.s32.totalorder %s23, 1
        %s194 = scalar_select %p193, %s23, 1
        %s195 = smul.addr %s194, 8
        %s196 = scalar_lea.vmem %s0, %s195
        %s197 = smul.u32 2, %s24
        %s198 = smul.u32 2, %s24
        %v199 = vld [vmem:[%s167] sm:$0xff]
        %v200 = vld [vmem:[%s167 + $0x8] sm:$0xff]
        %v201 = vmax.f32 %v199, -0.9999999
        %v202 = vmax.f32 %v200, -0.9999999
        %v203 = vmin.f32 %v201, 0.9999999
        %v204 = vmin.f32 %v202, 0.9999999
        %v205 = vld [vmem:[%s196] sm:$0xff]
        %v206 = vlaneseq
        %v207 = vand.u32 %v206, 127
        %v208 = vadd.s32 %v207, 128
        %s209 = smul.u32 %s24, 256
        %v210 = vstv %s209
        %v211 = vadd.s32 %v207, %v210
        %v212 = vadd.s32 %v208, %v210
        %213 = vset.pattern.permute.xlu0 0
        %214 = vperm.xlu0 %213, %v205
        %v215 = vpop.permute.xlu0 %214
        %vm216 = vcmp.eq.s32.totalorder %v211, %v215
        %vm217 = vcmp.eq.s32.totalorder %v212, %v215
        %v218 = vmul.f32 %v203, %v203
        %v219 = vmul.f32 %v204, %v204
        %v220 = vsub.f32 1.0, %v218
        %v221 = vsub.f32 1.0, %v219
        %v222 = vrsqrt.pop %v220
        %v223 = vmul.f32 %v222, %v220
        %v224 = vmul.f32 %v223, %v222
        %v225 = vmul.f32 0.5, %v224
        %v226 = vsub.f32 1.5, %v225
        %v227 = vmul.f32 %v222, %v226
        %v228 = vmul.f32 %v220, %v227
        %vm229 = vcmp.eq.f32.partialorder %v220, inf
        %v230 = vsel %vm229, %v220, %v228
        %vm231 = vcmp.eq.f32.partialorder %v220, 0.0
        %v232 = vand.u32 %v220, 2147483648
        %v233 = vsel %vm231, %v232, %v230
        %v234 = vrsqrt.pop %v221
        %v235 = vmul.f32 %v234, %v221
        %v236 = vmul.f32 %v235, %v234
        %v237 = vmul.f32 0.5, %v236
        %v238 = vsub.f32 1.5, %v237
        %v239 = vmul.f32 %v234, %v238
        %v240 = vmul.f32 %v221, %v239
        %vm241 = vcmp.eq.f32.partialorder %v221, inf
        %v242 = vsel %vm241, %v221, %v240
        %vm243 = vcmp.eq.f32.partialorder %v221, 0.0
        %v244 = vand.u32 %v221, 2147483648
        %v245 = vsel %vm243, %v244, %v242
        %v246 = vmul.f32 %v203, 0.87758255
        %v247 = vmul.f32 %v204, 0.87758255
        %v248 = vmul.f32 %v233, 0.47942555
        %v249 = vmul.f32 %v245, 0.47942555
        %v250 = vsub.f32 %v246, %v248
        %v251 = vsub.f32 %v247, %v249
        %v252 = vsel %vm216, %v250, %v203
        %v253 = vsel %vm217, %v251, %v204
        %v254 = vmul.f32 %v252, 64.0
        %v255 = vmul.f32 %v253, 64.0
        %256 = vst [vmem:[%s192] sm:$0xff] %v254
        %257 = vst [vmem:[%s192 + $0x8] sm:$0xff] %v255
        %s258 = sand.u32 %s95, 1
        %s259 = scalar_lea.sflag [#allocation4], %s258
        %s260 = sand.u32 %s95, 1
        %s261 = smul.addr %s260, 16
        %s262 = scalar_lea.vmem [#allocation5], %s261
        // Predicated region
        $region33: #{tpu_custom_call.1} parent=27 // pred_check
          %p263 = pneg %p105
        $region34: #{tpu_custom_call.1} parent=27 // pred_check_branch
          %265 = sbr.rel (%p263) target = $region36
        $region35: #{tpu_custom_call.1} parent=27 // pred_region
          %s266 = smul.u32 2, %s24
          %268 = vsyncadd %s259, 0
          %s269 = smul.addr %s23, 2
          %s270 = sadd.s32 %s266, %s269
          %s271 = smul.addr %s270, 8
          %s272 = scalar_lea.hbm %s2, %s271
          %s274 = sshll.u32 %s262, 4
          %s275 = int_to_ptr.vmem [resolvable:$true] %s274
          %s276 = sshll.u32 %s272, 4
          %s277 = int_to_ptr.hbm [resolvable:$true] %s276
          %279 = dma.vmem_to_hbm [thread:$0]  %s275, 256, %s277, %s259
        $region36: #{tpu_custom_call.1} parent=27 // pred_fallthru
          _
      $region28: #{tpu_custom_call.1} parent=5 // pred_fallthru
        _
      %p280 = scmp.le.s32.totalorder 2, %s14
      // Predicated region
      $region37: #{tpu_custom_call.1} parent=5 // pred_check
        %p281 = pneg %p280
      $region38: #{tpu_custom_call.1} parent=5 // pred_check_branch
        %283 = sbr.rel (%p281) target = $region40
      $region39: #{tpu_custom_call.1} parent=5 // pred_region
        %s284 = ssub.s32 %s14, 2
        // Predicated region
        $region41: #{tpu_custom_call.1} parent=39 // pred_check
          %p285 = pneg %p111
        $region42: #{tpu_custom_call.1} parent=39 // pred_check_branch
          %287 = sbr.rel (%p285) target = $region44
        $region43: #{tpu_custom_call.1} parent=39 // pred_region
          %s288 = sand.u32 %s96, 1
          %s289 = scalar_lea.sflag [#allocation4], %s288
          %s290 = sand.u32 %s96, 1
          %s291 = smul.addr %s290, 16
          %s292 = scalar_lea.vmem [#allocation5], %s291
          %294 = dma.done %s289, 256
        $region44: #{tpu_custom_call.1} parent=39 // pred_fallthru
          _
      $region40: #{tpu_custom_call.1} parent=5 // pred_fallthru
        _
    $region6: #{tpu_custom_call.1} parent=1 // loop_footer
      %s18 = sadd.s32 1, %s14
    $region7: #{tpu_custom_call.1} parent=1 // loop_footer_branch
      %13 = sbr.rel target = $region3
    $region8: #{tpu_custom_call.1} parent=1 // loop_exit
      _
    %295 = vsyncpa [#allocation3], 1
    %s296 = scalar_lea.sflag [#allocation3], 1
    %297 = vsyncpa %s296, 1
    %298 = vsyncpa [#allocation4], 1
    %s299 = scalar_lea.sflag [#allocation4], 1
    %300 = vsyncpa %s299, 1

</llo_original>
